<compile_context>
chip_gen: v5e
topology: v5e:2x2
jax: 0.10.0
libtpu: 0.0.40
codegen_flags: <defaults>
</compile_context>

<pallas_src>
import functools

import jax
import jax.numpy as jnp
from jax.experimental import pallas as pl
from jax.experimental.pallas import tpu as pltpu

INPUT_SIZE = 40      # per-branch feature size (x has 2*INPUT_SIZE columns)
MLP_HIDDEN = 32
OUTPUT_SIZE = 1

# Row offsets inside the packed parameter slab P (shape (176, MLP_HIDDEN), f32):
#   [0:40)    g.Linear1 weight  (40, 32)   [in, out]
#   [40:72)   g.Linear2 weight  (32, 32)
#   [72:104)  g.Linear3 weight  (32, 32)
#   [104:136) f.Linear1 weight, transposed (out, in) = (32, 32)
#   [136:168) f.Linear2 weight, transposed (out, in) = (32, 32)
#   row 168   g bias1, row 169 g bias2, row 170 g bias3, rows 171..175 zero pad.
_GW1, _GW2, _GW3, _FW1T, _FW2T = 0, 40, 72, 104, 136
_GB1, _GB2, _GB3 = 168, 169, 170
_P_ROWS = 176

# Columns of the second slab C (shape (MLP_HIDDEN, 4), f32):
#   col 0: f bias1 (as column), col 1: f bias2 (as column),
#   col 2: f.Linear3 weight (32->1) as column, col 3: f.Linear3 bias / H replicated.


def _round_up(n, m):
    return ((n + m - 1) // m) * m


def _rn_kernel(x_ref, p_ref, c_ref, o_ref, *, compute_dtype):
    tb = x_ref.shape[0]          # batch tile (static)
    H = MLP_HIDDEN
    IN = INPUT_SIZE

    x = x_ref[...]                                           # (tb, 2*IN) f32
    # Stack the two relation branches along the batch (sublane) axis so the
    # shared g-MLP runs once over 2*tb rows.
    s = jnp.concatenate([x[:, :IN], x[:, IN:]], axis=0)      # (2*tb, IN) f32

    def w(r0, r1):                                           # packed weight slice
        return p_ref[r0:r1, :].astype(compute_dtype)

    def brow(r):                                             # (1, H) f32 bias row
        return p_ref[r:r + 1, :]

    def lin_relu(h, wmat, bias_row):
        y = jnp.dot(h.astype(compute_dtype), wmat,
                    preferred_element_type=jnp.float32) + bias_row
        return jnp.maximum(y, 0.0)

    # g stage: three Linear->ReLU layers on the stacked rows.
    h = lin_relu(s, w(_GW1, _GW1 + IN), brow(_GB1))
    h = lin_relu(h, w(_GW2, _GW2 + H), brow(_GB2))
    h = lin_relu(h, w(_GW3, _GW3 + H), brow(_GB3))           # (2*tb, H) f32

    # Combine the two branches: a + b (sublane-aligned static slices).
    h = h[:tb, :] + h[tb:, :]                                # (tb, H) f32

    # f stage, transposed: features on sublanes, batch on the lane axis. This
    # keeps the MXU N-dimension wide and makes the output store lane-dense.
    ht = jnp.transpose(h).astype(compute_dtype)              # (H, tb)
    c = c_ref[...]                                           # (H, 4) f32

    y = jnp.dot(w(_FW1T, _FW1T + H), ht,
                preferred_element_type=jnp.float32) + c[:, 0:1]
    y = jnp.maximum(y, 0.0)                                  # (H, tb) f32
    y = jnp.dot(w(_FW2T, _FW2T + H), y.astype(compute_dtype),
                preferred_element_type=jnp.float32) + c[:, 1:2]
    y = jnp.maximum(y, 0.0)                                  # (H, tb) f32

    # Final 32->1 layer on the VPU/XLU: multiply by the weight column, fold the
    # bias in as fb3/H per row, then sum over the 32 sublanes -> (1, tb).
    z = jnp.sum(y * c[:, 2:3] + c[:, 3:4], axis=0, keepdims=True)
    o_ref[...] = jax.nn.sigmoid(z)                           # lane-dense (1, tb)


def init_params(key, input_size=INPUT_SIZE, hidden=MLP_HIDDEN, out=OUTPUT_SIZE):
    """Deterministic init mimicking PyTorch Linear default (uniform +-1/sqrt(fan_in)).
    Weights stored as [in, out] (already transposed vs. torch's [out, in])."""
    dims = [
        (input_size, hidden), (hidden, hidden), (hidden, hidden),   # g
        (hidden, hidden), (hidden, hidden), (hidden, out),          # f
    ]
    params = []
    for (fan_in, fan_out) in dims:
        key, kw, kb = jax.random.split(key, 3)
        bound = 1.0 / jnp.sqrt(float(fan_in))
        w = jax.random.uniform(kw, (fan_in, fan_out), jnp.float32, -bound, bound)
        b = jax.random.uniform(kb, (1, fan_out), jnp.float32, -bound, bound)
        params += [w, b]
    return params


def pack_params(params):
    """Pack the 12 parameter arrays into two f32 slabs (2 DMAs instead of 12)."""
    gw1, gb1, gw2, gb2, gw3, gb3, fw1, fb1, fw2, fb2, fw3, fb3 = params
    H = MLP_HIDDEN
    rows = [gw1, gw2, gw3,
            jnp.transpose(fw1), jnp.transpose(fw2),
            gb1.reshape(1, H), gb2.reshape(1, H), gb3.reshape(1, H)]
    P = jnp.concatenate(rows, axis=0).astype(jnp.float32)           # (171, H)
    P = jnp.pad(P, ((0, _P_ROWS - P.shape[0]), (0, 0)))             # (176, H)
    C = jnp.concatenate(
        [fb1.reshape(H, 1), fb2.reshape(H, 1), fw3.reshape(H, 1),
         jnp.broadcast_to(fb3.reshape(1, 1) / H, (H, 1))], axis=1)  # (H, 4)
    return P, C.astype(jnp.float32)


def rn_classifier(x, x_agents, params, *, block_b=512,
                  compute_dtype=jnp.bfloat16):
    """Forward pass. x: (B, 2*INPUT_SIZE) f32. x_agents is accepted but unused
    (matches the reference module). Returns (B, 1) f32 in [0, 1].
    On v5e prefer compute_dtype=jnp.float32 (no bf16 VPU there)."""
    del x_agents  # unused by the reference forward
    B = x.shape[0]
    assert x.shape[1] == 2 * INPUT_SIZE
    x = x.astype(jnp.float32)
    P, C = pack_params(params)

    # Batch tile: multiple of 8 (sublane); multiple of 128 when tiling so the
    # lane-dense (1, tb) output block satisfies the (8, 128) constraint.
    if B <= block_b:
        tb = _round_up(max(B, 1), 8)
    else:
        tb = _round_up(block_b, 128)
    b_pad = _round_up(B, tb)
    if b_pad != B:
        x = jnp.pad(x, ((0, b_pad - B), (0, 0)))
    num_tiles = b_pad // tb

    kernel = functools.partial(_rn_kernel, compute_dtype=compute_dtype)
    out = pl.pallas_call(
        kernel,
        out_shape=jax.ShapeDtypeStruct((1, b_pad), jnp.float32),
        grid=(num_tiles,),
        in_specs=[
            pl.BlockSpec((tb, 2 * INPUT_SIZE), lambda i: (i, 0)),   # batch tile of x
            pl.BlockSpec(P.shape, lambda i: (0, 0)),                # params: VMEM-resident
            pl.BlockSpec(C.shape, lambda i: (0, 0)),
        ],
        out_specs=pl.BlockSpec((1, tb), lambda i: (0, i)),          # lane-dense output row
        compiler_params=pltpu.CompilerParams(
            dimension_semantics=("parallel",)),
    )(x, P, C)
    return out[0, :B].reshape(B, OUTPUT_SIZE)


def _reference(x, params, compute_dtype=jnp.bfloat16):
    """Pure-JAX reference mirroring the kernel's dtype handling."""
    gw1, gb1, gw2, gb2, gw3, gb3, fw1, fb1, fw2, fb2, fw3, fb3 = params
    x = x.astype(jnp.float32)

    def lin_relu(h, w_, b_):
        y = jnp.dot(h.astype(compute_dtype), w_.astype(compute_dtype),
                    preferred_element_type=jnp.float32) + b_
        return jnp.maximum(y, 0.0)

    def g(h):
        h = lin_relu(h, gw1, gb1)
        h = lin_relu(h, gw2, gb2)
        return lin_relu(h, gw3, gb3)

    h = g(x[:, :INPUT_SIZE]) + g(x[:, INPUT_SIZE:])
    h = lin_relu(h, fw1, fb1)
    h = lin_relu(h, fw2, fb2)
    z = jnp.sum(h * fw3.reshape(1, MLP_HIDDEN), axis=-1, keepdims=True) \
        + fb3.reshape(1, 1)
    return jax.nn.sigmoid(z)


if __name__ == "__main__":
    key = jax.random.PRNGKey(0)
    k_param, k_x, k_agents, k_x2 = jax.random.split(key, 4)
    params = init_params(k_param)

    # Small-shape check (single tile, batch padded 20 -> 24).
    batch = 20
    x = jax.random.normal(k_x, (batch, 2 * INPUT_SIZE), jnp.float32)
    x_agents = jax.random.normal(k_agents, (batch, 4), jnp.float32)  # unused, per reference
    out = jax.block_until_ready(rn_classifier(x, x_agents, params))
    ref = _reference(x, params)
    assert out.shape == (batch, OUTPUT_SIZE)
    assert jnp.allclose(out, ref, atol=2e-3, rtol=2e-3), "mismatch vs reference (small batch)"

    # Multi-tile check (exercises batch tiling, pipelining and tail padding).
    batch2 = 1200
    x2 = jax.random.normal(k_x2, (batch2, 2 * INPUT_SIZE), jnp.float32)
    out2 = jax.block_until_ready(rn_classifier(x2, None, params, block_b=512))
    ref2 = _reference(x2, params)
    assert out2.shape == (batch2, OUTPUT_SIZE)
    assert jnp.allclose(out2, ref2, atol=2e-3, rtol=2e-3), "mismatch vs reference (tiled batch)"

    print("KERNEL_OK")
</pallas_src>

<mosaic_0001>
module attributes {stable_mosaic.version = 11 : i64} {
  func.func @_rn_kernel(%arg0: i32, %arg1: memref<24x80xf32, #tpu.memory_space<vmem>>, %arg2: memref<176x32xf32, #tpu.memory_space<vmem>>, %arg3: memref<32x4xf32, #tpu.memory_space<vmem>>, %arg4: memref<1x24xf32, #tpu.memory_space<vmem>>) attributes {dimension_semantics = [#tpu.dimension_semantics<parallel>], iteration_bounds = array<i64: 1>, scalar_prefetch = 0 : i64, scratch_operands = 0 : i64, tpu.core_type = #tpu.core_type<tc>, window_params = [{transform_indices = @transform_0, window_bounds = array<i64: 24, 80>}, {pipeline_mode = #tpu.pipeline_mode<synchronous>, transform_indices = @transform_1, window_bounds = array<i64: 176, 32>}, {pipeline_mode = #tpu.pipeline_mode<synchronous>, transform_indices = @transform_2, window_bounds = array<i64: 32, 4>}, {transform_indices = @transform_3, window_bounds = array<i64: 1, 24>}]} {
    %c0 = arith.constant 0 : index
    %c0_0 = arith.constant 0 : index
    %0 = vector.load %arg1[%c0, %c0_0] : memref<24x80xf32, #tpu.memory_space<vmem>>, vector<24x80xf32>
    %1 = vector.extract_strided_slice %0 {offsets = [0, 0], sizes = [24, 40], strides = [1, 1]} : vector<24x80xf32> to vector<24x40xf32>
    %2 = vector.extract_strided_slice %0 {offsets = [0, 40], sizes = [24, 40], strides = [1, 1]} : vector<24x80xf32> to vector<24x40xf32>
    %3 = tpu.concatenate %1, %2 in 0 : vector<24x40xf32>, vector<24x40xf32> -> vector<48x40xf32>
    %c0_1 = arith.constant 0 : index
    %c0_2 = arith.constant 0 : index
    %4 = vector.load %arg2[%c0_1, %c0_2] : memref<176x32xf32, #tpu.memory_space<vmem>>, vector<40x32xf32>
    %5 = arith.truncf %4 : vector<40x32xf32> to vector<40x32xbf16>
    %c168 = arith.constant 168 : index
    %c0_3 = arith.constant 0 : index
    %6 = vector.load %arg2[%c168, %c0_3] : memref<176x32xf32, #tpu.memory_space<vmem>>, vector<1x32xf32>
    %7 = arith.truncf %3 : vector<48x40xf32> to vector<48x40xbf16>
    %cst = arith.constant dense<0.000000e+00> : vector<48x32xf32>
    %8 = tpu.matmul %7, %5, %cst {dimension_numbers = #tpu.dot_dimension_numbers<[1], [0], [0], [1], [0, 0, 1, 1], [], []>} : vector<48x40xbf16>, vector<40x32xbf16>, vector<48x32xf32> -> vector<48x32xf32>
    %9 = vector.broadcast %6 : vector<1x32xf32> to vector<48x32xf32>
    %10 = arith.addf %8, %9 : vector<48x32xf32>
    %cst_4 = arith.constant 0.000000e+00 : f32
    %11 = vector.broadcast %cst_4 : f32 to vector<48x32xf32>
    %12 = arith.maximumf %10, %11 : vector<48x32xf32>
    %c40 = arith.constant 40 : index
    %c0_5 = arith.constant 0 : index
    %13 = vector.load %arg2[%c40, %c0_5] : memref<176x32xf32, #tpu.memory_space<vmem>>, vector<32x32xf32>
    %14 = arith.truncf %13 : vector<32x32xf32> to vector<32x32xbf16>
    %c169 = arith.constant 169 : index
    %c0_6 = arith.constant 0 : index
    %15 = vector.load %arg2[%c169, %c0_6] : memref<176x32xf32, #tpu.memory_space<vmem>>, vector<1x32xf32>
    %16 = arith.truncf %12 : vector<48x32xf32> to vector<48x32xbf16>
    %cst_7 = arith.constant dense<0.000000e+00> : vector<48x32xf32>
    %17 = tpu.matmul %16, %14, %cst_7 {dimension_numbers = #tpu.dot_dimension_numbers<[1], [0], [0], [1], [0, 0, 1, 1], [], []>} : vector<48x32xbf16>, vector<32x32xbf16>, vector<48x32xf32> -> vector<48x32xf32>
    %18 = vector.broadcast %15 : vector<1x32xf32> to vector<48x32xf32>
    %19 = arith.addf %17, %18 : vector<48x32xf32>
    %cst_8 = arith.constant 0.000000e+00 : f32
    %20 = vector.broadcast %cst_8 : f32 to vector<48x32xf32>
    %21 = arith.maximumf %19, %20 : vector<48x32xf32>
    %c72 = arith.constant 72 : index
    %c0_9 = arith.constant 0 : index
    %22 = vector.load %arg2[%c72, %c0_9] : memref<176x32xf32, #tpu.memory_space<vmem>>, vector<32x32xf32>
    %23 = arith.truncf %22 : vector<32x32xf32> to vector<32x32xbf16>
    %c170 = arith.constant 170 : index
    %c0_10 = arith.constant 0 : index
    %24 = vector.load %arg2[%c170, %c0_10] : memref<176x32xf32, #tpu.memory_space<vmem>>, vector<1x32xf32>
    %25 = arith.truncf %21 : vector<48x32xf32> to vector<48x32xbf16>
    %cst_11 = arith.constant dense<0.000000e+00> : vector<48x32xf32>
    %26 = tpu.matmul %25, %23, %cst_11 {dimension_numbers = #tpu.dot_dimension_numbers<[1], [0], [0], [1], [0, 0, 1, 1], [], []>} : vector<48x32xbf16>, vector<32x32xbf16>, vector<48x32xf32> -> vector<48x32xf32>
    %27 = vector.broadcast %24 : vector<1x32xf32> to vector<48x32xf32>
    %28 = arith.addf %26, %27 : vector<48x32xf32>
    %cst_12 = arith.constant 0.000000e+00 : f32
    %29 = vector.broadcast %cst_12 : f32 to vector<48x32xf32>
    %30 = arith.maximumf %28, %29 : vector<48x32xf32>
    %31 = vector.extract_strided_slice %30 {offsets = [0, 0], sizes = [24, 32], strides = [1, 1]} : vector<48x32xf32> to vector<24x32xf32>
    %32 = vector.extract_strided_slice %30 {offsets = [24, 0], sizes = [24, 32], strides = [1, 1]} : vector<48x32xf32> to vector<24x32xf32>
    %33 = arith.addf %31, %32 : vector<24x32xf32>
    %34 = tpu.transpose %33, [1, 0] : vector<24x32xf32> -> vector<32x24xf32>
    %35 = arith.truncf %34 : vector<32x24xf32> to vector<32x24xbf16>
    %c0_13 = arith.constant 0 : index
    %c0_14 = arith.constant 0 : index
    %36 = vector.load %arg3[%c0_13, %c0_14] : memref<32x4xf32, #tpu.memory_space<vmem>>, vector<32x4xf32>
    %c104 = arith.constant 104 : index
    %c0_15 = arith.constant 0 : index
    %37 = vector.load %arg2[%c104, %c0_15] : memref<176x32xf32, #tpu.memory_space<vmem>>, vector<32x32xf32>
    %38 = arith.truncf %37 : vector<32x32xf32> to vector<32x32xbf16>
    %cst_16 = arith.constant dense<0.000000e+00> : vector<32x24xf32>
    %39 = tpu.matmul %38, %35, %cst_16 {dimension_numbers = #tpu.dot_dimension_numbers<[1], [0], [0], [1], [0, 0, 1, 1], [], []>} : vector<32x32xbf16>, vector<32x24xbf16>, vector<32x24xf32> -> vector<32x24xf32>
    %40 = vector.extract_strided_slice %36 {offsets = [0, 0], sizes = [32, 1], strides = [1, 1]} : vector<32x4xf32> to vector<32x1xf32>
    %41 = vector.broadcast %40 : vector<32x1xf32> to vector<32x24xf32>
    %42 = arith.addf %39, %41 : vector<32x24xf32>
    %cst_17 = arith.constant 0.000000e+00 : f32
    %43 = vector.broadcast %cst_17 : f32 to vector<32x24xf32>
    %44 = arith.maximumf %42, %43 : vector<32x24xf32>
    %c136 = arith.constant 136 : index
    %c0_18 = arith.constant 0 : index
    %45 = vector.load %arg2[%c136, %c0_18] : memref<176x32xf32, #tpu.memory_space<vmem>>, vector<32x32xf32>
    %46 = arith.truncf %45 : vector<32x32xf32> to vector<32x32xbf16>
    %47 = arith.truncf %44 : vector<32x24xf32> to vector<32x24xbf16>
    %cst_19 = arith.constant dense<0.000000e+00> : vector<32x24xf32>
    %48 = tpu.matmul %46, %47, %cst_19 {dimension_numbers = #tpu.dot_dimension_numbers<[1], [0], [0], [1], [0, 0, 1, 1], [], []>} : vector<32x32xbf16>, vector<32x24xbf16>, vector<32x24xf32> -> vector<32x24xf32>
    %49 = vector.extract_strided_slice %36 {offsets = [0, 1], sizes = [32, 1], strides = [1, 1]} : vector<32x4xf32> to vector<32x1xf32>
    %50 = vector.broadcast %49 : vector<32x1xf32> to vector<32x24xf32>
    %51 = arith.addf %48, %50 : vector<32x24xf32>
    %cst_20 = arith.constant 0.000000e+00 : f32
    %52 = vector.broadcast %cst_20 : f32 to vector<32x24xf32>
    %53 = arith.maximumf %51, %52 : vector<32x24xf32>
    %54 = vector.extract_strided_slice %36 {offsets = [0, 2], sizes = [32, 1], strides = [1, 1]} : vector<32x4xf32> to vector<32x1xf32>
    %55 = vector.broadcast %54 : vector<32x1xf32> to vector<32x24xf32>
    %56 = arith.mulf %53, %55 : vector<32x24xf32>
    %57 = vector.extract_strided_slice %36 {offsets = [0, 3], sizes = [32, 1], strides = [1, 1]} : vector<32x4xf32> to vector<32x1xf32>
    %58 = vector.broadcast %57 : vector<32x1xf32> to vector<32x24xf32>
    %59 = arith.addf %56, %58 : vector<32x24xf32>
    %cst_21 = arith.constant dense<0.000000e+00> : vector<24xf32>
    %60 = vector.multi_reduction <add>, %59, %cst_21 [0] : vector<32x24xf32> to vector<24xf32>
    %61 = vector.shape_cast %60 : vector<24xf32> to vector<1x24xf32>
    %62 = arith.negf %61 : vector<1x24xf32>
    %63 = math.exp %62 : vector<1x24xf32>
    %cst_22 = arith.constant 1.000000e+00 : f32
    %64 = vector.broadcast %cst_22 : f32 to vector<1x24xf32>
    %65 = arith.addf %64, %63 : vector<1x24xf32>
    %66 = arith.divf %64, %65 : vector<1x24xf32>
    %c0_23 = arith.constant 0 : index
    %c0_24 = arith.constant 0 : index
    %67 = vector.load %arg4[%c0_23, %c0_24] : memref<1x24xf32, #tpu.memory_space<vmem>>, vector<1x24xf32>
    tpu.vector_store %arg4[%c0_23, %c0_24], %66 {strides = array<i32>} : memref<1x24xf32, #tpu.memory_space<vmem>>, vector<1x24xf32>,
    return
  }
  func.func @transform_0(%arg0: i32) -> (i32, i32) {
    %c0_i32 = arith.constant 0 : i32
    %c0_i32_0 = arith.constant 0 : i32
    return %arg0, %c0_i32 : i32, i32
  }
  func.func @transform_1(%arg0: i32) -> (i32, i32) {
    %c0_i32 = arith.constant 0 : i32
    %c0_i32_0 = arith.constant 0 : i32
    %c0_i32_1 = arith.constant 0 : i32
    return %c0_i32, %c0_i32_0 : i32, i32
  }
  func.func @transform_2(%arg0: i32) -> (i32, i32) {
    %c0_i32 = arith.constant 0 : i32
    %c0_i32_0 = arith.constant 0 : i32
    %c0_i32_1 = arith.constant 0 : i32
    return %c0_i32, %c0_i32_0 : i32, i32
  }
  func.func @transform_3(%arg0: i32) -> (i32, i32) {
    %c0_i32 = arith.constant 0 : i32
    %c0_i32_0 = arith.constant 0 : i32
    return %c0_i32, %arg0 : i32, i32
  }
}

</mosaic_0001>

<llo_original>
// kernel: tpu_custom_call.1
$region0: #{tpu_custom_call.1}
  #allocation0 [shape = 'u32[]', space=smem, size = 0x4, offset = 0x4, fixed_abs, tag = 'smem constant byte address 0x4 - core index']
  #allocation1 [shape = 'u32[72,128]{1,0:T(1,128)}', space=vmem, size = 0x9000, scoped, tag = 'internal scratch']
  %s0 = inlined_call_operand.vmem [shape: f32[24,80], index: 0, kind: input, shape index: {}]
  %s1 = inlined_call_operand.vmem [shape: f32[176,32], index: 1, kind: input, shape index: {}]
  %s2 = inlined_call_operand.vmem [shape: f32[32,4], index: 2, kind: input, shape index: {}]
  %s3 = inlined_call_operand.hbm [shape: f32[1,24], index: 3, kind: output, shape index: {}]
  %s4 = sld [smem:[#allocation0]]
  $region22: #{tpu_custom_call.1} parent=0
    _
  %s6 = ssub.s32 1, %s4
  %s7 = scalar_select 0, %s6, %s4
  $region1: #{tpu_custom_call.1} parent=0
    #allocation2 [shape = 'u8[512]{0}', space=vmem, size = 0x400, scoped, tag = 'output window, operand 0, single buffered']
    #allocation3 [shape = 's32[1]{0}', space=sflag, size = 0x4, scoped, tag = 'scoped memory for tpu_custom_call.1']
    %8 = vsyncpa [#allocation3], 0
    // Predicated region
    $region2: #{tpu_custom_call.1} parent=1 // pred_check
      _
    $region3: #{tpu_custom_call.1} parent=1 // pred_check_branch
      %10 = sbr.rel (0) target = $region5
    $region4: #{tpu_custom_call.1} parent=1 // pred_region
      _
    $region5: #{tpu_custom_call.1} parent=1 // pred_fallthru
      _
    // Predicated region
    $region6: #{tpu_custom_call.1} parent=1 // pred_check
      _
    $region7: #{tpu_custom_call.1} parent=1 // pred_check_branch
      %12 = sbr.rel (0) target = $region9
    $region8: #{tpu_custom_call.1} parent=1 // pred_region
      _
    $region9: #{tpu_custom_call.1} parent=1 // pred_fallthru
      _
    // Predicated region
    $region10: #{tpu_custom_call.1} parent=1 // pred_check
      _
    $region11: #{tpu_custom_call.1} parent=1 // pred_check_branch
      %14 = sbr.rel (0) target = $region13
    $region12: #{tpu_custom_call.1} parent=1 // pred_region
      _
    $region13: #{tpu_custom_call.1} parent=1 // pred_fallthru
      _
    %v16 = vld [vmem:[%s0] sm:$0xff]
    %v17 = vld [vmem:[%s0 + $0x8] sm:$0xff]
    %v18 = vld [vmem:[%s0 + $0x10] sm:$0xff]
    %22 = vrot.lane.b32.xlu0 %v16, 88
    %v23 = vpop.permute.xlu0 %22
    %24 = vrot.lane.b32.xlu0 %v17, 88
    %v25 = vpop.permute.xlu0 %24
    %26 = vrot.lane.b32.xlu0 %v18, 88
    %v27 = vpop.permute.xlu0 %26
    %v31 = vld [vmem:[%s1] sm:$0xff]
    %v32 = vld [vmem:[%s1 + $0x8] sm:$0xff]
    %v33 = vld [vmem:[%s1 + $0x10] sm:$0xff]
    %v34 = vld [vmem:[%s1 + $0x18] sm:$0xff]
    %v35 = vld [vmem:[%s1 + $0x20] sm:$0xff]
    %v36 = vpack.c.bf16 %v32, %v31
    %v37 = vpack.c.bf16 %v34, %v33
    %v38 = vpack.c.bf16 %v35, %v35
    %v39 = vld [vmem:[%s1 + $0xa8] sm:$0x1]
    %v40 = vpack.c.bf16 %v17, %v16
    %v41 = vpack.c.bf16 %v23, %v18
    %v42 = vpack.c.bf16 %v27, %v25
    %v43 = vperm.slane %v39, 0
    %vm44 = vcmask 326656
    %v46 = vsel %vm44, %v40, 0
    %v49 = vsel %vm44, %v41, 0
    %v52 = vsel %vm44, %v42, 0
    %vm54 = vcmask 1043456
    %v56 = vsel %vm54, %v38, 0
    %58 = vmatpush.bf16.msra.mxu0 0
    %59 = vmatpush.bf16.msra.mxu0 0
    %60 = vmatpush.bf16.msra.mxu0 0
    %61 = vmatpush.bf16.msra.mxu0 0
    %62 = vmatpush.bf16.msra.mxu0 0
    %63 = vmatpush.bf16.msra.mxu0 %v56
    %64 = vmatpush.bf16.msra.mxu0 %v37
    %65 = vmatpush.bf16.msra.mxu0 %v36
    %66 = vmatmul.bf16.gmra.mxu0 %v46
    %v67 = vpop.f32.mrf.mxu0
    %v68 = vadd.f32 %v43, %v67
    %v69 = vpop.f32.mrf.mxu0
    %v70 = vadd.f32 %v43, %v69
    %71 = vmatmul.bf16.gmra.mxu0 %v49
    %v72 = vpop.f32.mrf.mxu0
    %v73 = vadd.f32 %v43, %v72
    %v74 = vpop.f32.mrf.mxu0
    %v75 = vadd.f32 %v43, %v74
    %76 = vmatmul.bf16.gmra.mxu0 %v52
    %v77 = vpop.f32.mrf.mxu0
    %v78 = vadd.f32 %v43, %v77
    %v79 = vpop.f32.mrf.mxu0
    %v80 = vadd.f32 %v43, %v79
    %81 = vdwg.mxu0
    %v82 = vmax.f32 %v68, 0.0
    %v83 = vmax.f32 %v70, 0.0
    %v84 = vmax.f32 %v73, 0.0
    %v85 = vmax.f32 %v75, 0.0
    %v86 = vmax.f32 %v78, 0.0
    %v87 = vmax.f32 %v80, 0.0
    %v88 = vld [vmem:[%s1 + $0x28] sm:$0xff]
    %v89 = vld [vmem:[%s1 + $0x30] sm:$0xff]
    %v90 = vld [vmem:[%s1 + $0x38] sm:$0xff]
    %v91 = vld [vmem:[%s1 + $0x40] sm:$0xff]
    %v92 = vpack.c.bf16 %v89, %v88
    %v93 = vpack.c.bf16 %v91, %v90
    %v94 = vld [vmem:[%s1 + $0xa9] sm:$0x1]
    %v95 = vpack.c.bf16 %v83, %v82
    %v96 = vpack.c.bf16 %v85, %v84
    %v97 = vpack.c.bf16 %v87, %v86
    %v98 = vperm.slane %v94, 0
    %vm99 = vcmask 261120
    %v101 = vsel %vm99, %v95, 0
    %v104 = vsel %vm99, %v96, 0
    %v107 = vsel %vm99, %v97, 0
    %109 = vmatpush.bf16.msra.mxu0 0
    %110 = vmatpush.bf16.msra.mxu0 0
    %111 = vmatpush.bf16.msra.mxu0 0
    %112 = vmatpush.bf16.msra.mxu0 0
    %113 = vmatpush.bf16.msra.mxu0 0
    %114 = vmatpush.bf16.msra.mxu0 0
    %115 = vmatpush.bf16.msra.mxu0 %v93
    %116 = vmatpush.bf16.msra.mxu0 %v92
    %117 = vmatmul.bf16.gmra.mxu0 %v101
    %v118 = vpop.f32.mrf.mxu0
    %v119 = vadd.f32 %v98, %v118
    %v120 = vpop.f32.mrf.mxu0
    %v121 = vadd.f32 %v98, %v120
    %122 = vmatmul.bf16.gmra.mxu0 %v104
    %v123 = vpop.f32.mrf.mxu0
    %v124 = vadd.f32 %v98, %v123
    %v125 = vpop.f32.mrf.mxu0
    %v126 = vadd.f32 %v98, %v125
    %127 = vmatmul.bf16.gmra.mxu0 %v107
    %v128 = vpop.f32.mrf.mxu0
    %v129 = vadd.f32 %v98, %v128
    %v130 = vpop.f32.mrf.mxu0
    %v131 = vadd.f32 %v98, %v130
    %132 = vdwg.mxu0
    %v133 = vmax.f32 %v119, 0.0
    %v134 = vmax.f32 %v121, 0.0
    %v135 = vmax.f32 %v124, 0.0
    %v136 = vmax.f32 %v126, 0.0
    %v137 = vmax.f32 %v129, 0.0
    %v138 = vmax.f32 %v131, 0.0
    %v139 = vld [vmem:[%s1 + $0x48] sm:$0xff]
    %v140 = vld [vmem:[%s1 + $0x50] sm:$0xff]
    %v141 = vld [vmem:[%s1 + $0x58] sm:$0xff]
    %v142 = vld [vmem:[%s1 + $0x60] sm:$0xff]
    %v143 = vpack.c.bf16 %v140, %v139
    %v144 = vpack.c.bf16 %v142, %v141
    %v145 = vld [vmem:[%s1 + $0xaa] sm:$0x1]
    %v146 = vpack.c.bf16 %v134, %v133
    %v147 = vpack.c.bf16 %v136, %v135
    %v148 = vpack.c.bf16 %v138, %v137
    %v149 = vperm.slane %v145, 0
    %v151 = vsel %vm99, %v146, 0
    %v154 = vsel %vm99, %v147, 0
    %v157 = vsel %vm99, %v148, 0
    %159 = vmatpush.bf16.msra.mxu0 0
    %160 = vmatpush.bf16.msra.mxu0 0
    %161 = vmatpush.bf16.msra.mxu0 0
    %162 = vmatpush.bf16.msra.mxu0 0
    %163 = vmatpush.bf16.msra.mxu0 0
    %164 = vmatpush.bf16.msra.mxu0 0
    %165 = vmatpush.bf16.msra.mxu0 %v144
    %166 = vmatpush.bf16.msra.mxu0 %v143
    %167 = vmatmul.bf16.gmra.mxu0 %v151
    %v168 = vpop.f32.mrf.mxu0
    %v169 = vadd.f32 %v149, %v168
    %v170 = vpop.f32.mrf.mxu0
    %v171 = vadd.f32 %v149, %v170
    %172 = vmatmul.bf16.gmra.mxu0 %v154
    %v173 = vpop.f32.mrf.mxu0
    %v174 = vadd.f32 %v149, %v173
    %v175 = vpop.f32.mrf.mxu0
    %v176 = vadd.f32 %v149, %v175
    %177 = vmatmul.bf16.gmra.mxu0 %v157
    %v178 = vpop.f32.mrf.mxu0
    %v179 = vadd.f32 %v149, %v178
    %v180 = vpop.f32.mrf.mxu0
    %v181 = vadd.f32 %v149, %v180
    %182 = vdwg.mxu0
    %v183 = vmax.f32 %v169, 0.0
    %v184 = vmax.f32 %v171, 0.0
    %v185 = vmax.f32 %v174, 0.0
    %v186 = vmax.f32 %v176, 0.0
    %v187 = vmax.f32 %v179, 0.0
    %v188 = vmax.f32 %v181, 0.0
    %v189 = vadd.f32 %v183, %v186
    %v190 = vadd.f32 %v184, %v187
    %v191 = vadd.f32 %v185, %v188
    %192 = vxpose.xlu0.b32.start [1/16] %v189, 128
    %193 = vxpose.xlu0.b32.cont [2/16] %v190, 128
    %194 = vxpose.xlu0.b32.cont [3/16] %v191, 128
    %195 = vxpose.xlu0.b32.cont [4/16] 0.0, 128
    %196 = vxpose.xlu0.b32.cont [5/16] 0.0, 128
    %197 = vxpose.xlu0.b32.cont [6/16] 0.0, 128
    %198 = vxpose.xlu0.b32.cont [7/16] 0.0, 128
    %199 = vxpose.xlu0.b32.cont [8/16] 0.0, 128
    %200 = vxpose.xlu0.b32.cont [9/16] 0.0, 128
    %201 = vxpose.xlu0.b32.cont [10/16] 0.0, 128
    %202 = vxpose.xlu0.b32.cont [11/16] 0.0, 128
    %203 = vxpose.xlu0.b32.cont [12/16] 0.0, 128
    %204 = vxpose.xlu0.b32.cont [13/16] 0.0, 128
    %205 = vxpose.xlu0.b32.cont [14/16] 0.0, 128
    %206 = vxpose.xlu0.b32.cont [15/16] 0.0, 128
    %207 = vxpose.xlu0.b32.end [16/16] 0.0, 128
    %v208 = vpop.trf.xlu0
    %v209 = vpop.trf.xlu0
    %v210 = vpop.trf.xlu0
    %v211 = vpop.trf.xlu0
    %v212 = vpop.trf.xlu0
    %v213 = vpop.trf.xlu0
    %v214 = vpop.trf.xlu0
    %v215 = vpop.trf.xlu0
    %v216 = vpop.trf.xlu0
    %v217 = vpop.trf.xlu0
    %v218 = vpop.trf.xlu0
    %v219 = vpop.trf.xlu0
    %v220 = vpop.trf.xlu0
    %v221 = vpop.trf.xlu0
    %v222 = vpop.trf.xlu0
    %v223 = vpop.trf.xlu0
    %v224 = vpack.c.bf16 %v209, %v208
    %v225 = vpack.c.bf16 %v211, %v210
    %v226 = vld [vmem:[%s2] sm:$0xff]
    %v227 = vld [vmem:[%s2 + $0x8] sm:$0xff]
    %v228 = vld [vmem:[%s2 + $0x10] sm:$0xff]
    %v229 = vld [vmem:[%s2 + $0x18] sm:$0xff]
    %v230 = vld [vmem:[%s1 + $0x68] sm:$0xff]
    %v231 = vld [vmem:[%s1 + $0x70] sm:$0xff]
    %v232 = vld [vmem:[%s1 + $0x78] sm:$0xff]
    %v233 = vld [vmem:[%s1 + $0x80] sm:$0xff]
    %v234 = vpack.c.bf16 %v231, %v230
    %v235 = vpack.c.bf16 %v233, %v232
    %237 = vset.pattern.permute.xlu0 0
    %238 = vperm.xlu0 %237, %v226
    %v239 = vpop.permute.xlu0 %238
    %242 = vset.pattern.permute.xlu0 0
    %243 = vperm.xlu0 %242, %v227
    %v244 = vpop.permute.xlu0 %243
    %247 = vset.pattern.permute.xlu0 0
    %248 = vperm.xlu0 %247, %v228
    %v249 = vpop.permute.xlu0 %248
    %252 = vset.pattern.permute.xlu0 0
    %253 = vperm.xlu0 %252, %v229
    %v254 = vpop.permute.xlu0 %253
    %v257 = vsel %vm99, %v234, 0
    %v260 = vsel %vm99, %v235, 0
    %262 = vmatpush.bf16.msra.mxu0 0
    %263 = vmatpush.bf16.msra.mxu0 0
    %264 = vmatpush.bf16.msra.mxu0 0
    %265 = vmatpush.bf16.msra.mxu0 0
    %266 = vmatpush.bf16.msra.mxu0 0
    %267 = vmatpush.bf16.msra.mxu0 0
    %268 = vmatpush.bf16.msra.mxu0 %v225
    %269 = vmatpush.bf16.msra.mxu0 %v224
    %270 = vmatmul.bf16.gmra.mxu0 %v257
    %v271 = vpop.f32.mrf.mxu0
    %v272 = vadd.f32 %v239, %v271
    %v273 = vpop.f32.mrf.mxu0
    %v274 = vadd.f32 %v244, %v273
    %275 = vmatmul.bf16.gmra.mxu0 %v260
    %v276 = vpop.f32.mrf.mxu0
    %v277 = vadd.f32 %v249, %v276
    %v278 = vpop.f32.mrf.mxu0
    %v279 = vadd.f32 %v254, %v278
    %280 = vdwg.mxu0
    %v281 = vmax.f32 %v272, 0.0
    %v282 = vmax.f32 %v274, 0.0
    %v283 = vmax.f32 %v277, 0.0
    %v284 = vmax.f32 %v279, 0.0
    %v285 = vld [vmem:[%s1 + $0x88] sm:$0xff]
    %v286 = vld [vmem:[%s1 + $0x90] sm:$0xff]
    %v287 = vld [vmem:[%s1 + $0x98] sm:$0xff]
    %v288 = vld [vmem:[%s1 + $0xa0] sm:$0xff]
    %v289 = vpack.c.bf16 %v286, %v285
    %v290 = vpack.c.bf16 %v288, %v287
    %v291 = vpack.c.bf16 %v282, %v281
    %v292 = vpack.c.bf16 %v284, %v283
    %293 = vset.pattern.permute.xlu0 1
    %294 = vperm.xlu0 %293, %v226
    %v295 = vpop.permute.xlu0 %294
    %297 = vset.pattern.permute.xlu0 1
    %298 = vperm.xlu0 %297, %v227
    %v299 = vpop.permute.xlu0 %298
    %301 = vset.pattern.permute.xlu0 1
    %302 = vperm.xlu0 %301, %v228
    %v303 = vpop.permute.xlu0 %302
    %305 = vset.pattern.permute.xlu0 1
    %306 = vperm.xlu0 %305, %v229
    %v307 = vpop.permute.xlu0 %306
    %v310 = vsel %vm99, %v289, 0
    %v313 = vsel %vm99, %v290, 0
    %315 = vmatpush.bf16.msra.mxu0 0
    %316 = vmatpush.bf16.msra.mxu0 0
    %317 = vmatpush.bf16.msra.mxu0 0
    %318 = vmatpush.bf16.msra.mxu0 0
    %319 = vmatpush.bf16.msra.mxu0 0
    %320 = vmatpush.bf16.msra.mxu0 0
    %321 = vmatpush.bf16.msra.mxu0 %v292
    %322 = vmatpush.bf16.msra.mxu0 %v291
    %323 = vmatmul.bf16.gmra.mxu0 %v310
    %v324 = vpop.f32.mrf.mxu0
    %v325 = vadd.f32 %v295, %v324
    %v326 = vpop.f32.mrf.mxu0
    %v327 = vadd.f32 %v299, %v326
    %328 = vmatmul.bf16.gmra.mxu0 %v313
    %v329 = vpop.f32.mrf.mxu0
    %v330 = vadd.f32 %v303, %v329
    %v331 = vpop.f32.mrf.mxu0
    %v332 = vadd.f32 %v307, %v331
    %333 = vdwg.mxu0
    %v334 = vmax.f32 %v325, 0.0
    %v335 = vmax.f32 %v327, 0.0
    %v336 = vmax.f32 %v330, 0.0
    %v337 = vmax.f32 %v332, 0.0
    %338 = vset.pattern.permute.xlu0 2
    %339 = vperm.xlu0 %338, %v226
    %v340 = vpop.permute.xlu0 %339
    %342 = vset.pattern.permute.xlu0 2
    %343 = vperm.xlu0 %342, %v227
    %v344 = vpop.permute.xlu0 %343
    %346 = vset.pattern.permute.xlu0 2
    %347 = vperm.xlu0 %346, %v228
    %v348 = vpop.permute.xlu0 %347
    %350 = vset.pattern.permute.xlu0 2
    %351 = vperm.xlu0 %350, %v229
    %v352 = vpop.permute.xlu0 %351
    %v354 = vmul.f32 %v334, %v340
    %v355 = vmul.f32 %v335, %v344
    %v356 = vmul.f32 %v336, %v348
    %v357 = vmul.f32 %v337, %v352
    %358 = vset.pattern.permute.xlu0 3
    %359 = vperm.xlu0 %358, %v226
    %v360 = vpop.permute.xlu0 %359
    %362 = vset.pattern.permute.xlu0 3
    %363 = vperm.xlu0 %362, %v227
    %v364 = vpop.permute.xlu0 %363
    %366 = vset.pattern.permute.xlu0 3
    %367 = vperm.xlu0 %366, %v228
    %v368 = vpop.permute.xlu0 %367
    %370 = vset.pattern.permute.xlu0 3
    %371 = vperm.xlu0 %370, %v229
    %v372 = vpop.permute.xlu0 %371
    %v374 = vadd.f32 %v354, %v360
    %v375 = vadd.f32 %v355, %v364
    %v376 = vadd.f32 %v356, %v368
    %v377 = vadd.f32 %v357, %v372
    %vm378 = vcmask 195584
    %v379 = vsel %vm378, %v374, 0.0
    %v380 = vsel %vm378, %v375, 0.0
    %v381 = vadd.f32 %v379, %v380
    %v382 = vsel %vm378, %v376, 0.0
    %v383 = vadd.f32 %v381, %v382
    %v384 = vsel %vm378, %v377, 0.0
    %v385 = vadd.f32 %v383, %v384
    %v386 = vrot.slane %v385, 4
    %v387 = vadd.f32 %v385, %v386
    %v388 = vrot.slane %v387, 2
    %v389 = vadd.f32 %v387, %v388
    %v390 = vrot.slane %v389, 1
    %v391 = vadd.f32 %v389, %v390
    %v392 = vxor.u32 %v391, 2147483648
    %v393 = vmul.f32 %v392, 1.442695
    %v394 = vpow.pop %v393
    %v395 = vadd.f32 %v394, 1.0
    %v396 = vrcp.pop %v395
    %v397 = vmul.f32 %v395, %v396
    %v398 = vsub.f32 1.0, %v397
    %v399 = vmul.f32 %v396, %v398
    %v400 = vadd.f32 %v396, %v399
    %vm401 = vweird.f32 %v395
    %vm402 = vweird.f32 %v396
    %vm403 = vmor %vm401, %vm402
    %v404 = vsel %vm403, %v396, %v400
    %v405 = vand.u32 2147483647, %v395
    %vm406 = vcmp.eq.f32.partialorder %v405, 8.507059e+37
    %v407 = vand.u32 %v395, 2147483648
    %v408 = vor.u32 1.1754944e-38, %v407
    %v409 = vsel %vm406, %v408, %v404
    %v410 = vmul.f32 1.0, %v409
    %vm411 = vcmask 188416
    %412 = vst.msk [vmem:[#allocation2] sm:$0x1] %vm411, %v410
    // Predicated region
    $region14: #{tpu_custom_call.1} parent=1 // pred_check
      _
    $region15: #{tpu_custom_call.1} parent=1 // pred_check_branch
      %414 = sbr.rel (0) target = $region17
    $region16: #{tpu_custom_call.1} parent=1 // pred_region
      %416 = vsyncadd [#allocation3], 0
      %s418 = sshll.u32 [#allocation2], 4
      %s419 = int_to_ptr.vmem [resolvable:$true] %s418
      %s420 = sshll.u32 %s3, 4
      %s421 = int_to_ptr.hbm [resolvable:$true] %s420
      %423 = dma.vmem_to_hbm [thread:$0]  %s419, 16, %s421, [#allocation3]
    $region17: #{tpu_custom_call.1} parent=1 // pred_fallthru
      _
    // Predicated region
    $region18: #{tpu_custom_call.1} parent=1 // pred_check
      _
    $region19: #{tpu_custom_call.1} parent=1 // pred_check_branch
      %425 = sbr.rel (0) target = $region21
    $region20: #{tpu_custom_call.1} parent=1 // pred_region
      %427 = dma.done [#allocation3], 16
    $region21: #{tpu_custom_call.1} parent=1 // pred_fallthru
      _
    %428 = vsyncpa [#allocation3], 1

</llo_original>
